<compile_context>
chip_gen: v5e
topology: v5e:2x2
jax: 0.10.0
libtpu: 0.0.40
codegen_flags: <defaults>
</compile_context>

<pallas_src>
import functools

import jax
import jax.numpy as jnp
from jax.experimental import pallas as pl
from jax.experimental.pallas import tpu as pltpu

_LANES = 128
_SUBLANES = 8


def _round_up(v, m):
    return ((v + m - 1) // m) * m


def _autoencoder_kernel(*refs, act_flags, negative_slope):
    """refs = (x_ref, w0, b0, w1, b1, ..., o_ref); everything already in VMEM."""
    x_ref, o_ref = refs[0], refs[-1]
    param_refs = refs[1:-1]
    h = x_ref[...]
    for i, apply_act in enumerate(act_flags):
        w = param_refs[2 * i][...]
        b = param_refs[2 * i + 1][...]            # [1, out] row -> broadcast
        h = jnp.dot(h, w, preferred_element_type=jnp.float32) + b
        if apply_act:
            h = jnp.maximum(h, negative_slope * h)  # LeakyReLU(0.1), one vmax
    o_ref[...] = h.astype(o_ref.dtype)


def prepare_params(params, layer_sizes):
    """One-time param prep (hoisted off the hot path).

    Pads the LAST layer's output features to a multiple of 128 lanes (zero W
    columns / zero bias entries -> unmasked lane-dense final store) and
    reshapes biases to (1, out) rows. Returns everything the forward needs.
    """
    n_enc = len(layer_sizes) - 1
    n_total = 2 * n_enc
    assert len(params) == n_total
    out_dim = params[-1][0].shape[1]
    padded_out = _round_up(out_dim, _LANES)

    flat = []
    for idx, (w, b) in enumerate(params):
        w = jnp.asarray(w, jnp.float32)
        b = jnp.asarray(b, jnp.float32)
        if idx == n_total - 1 and w.shape[1] != padded_out:
            pad = padded_out - w.shape[1]
            w = jnp.pad(w, ((0, 0), (0, pad)))
            b = jnp.pad(b, (0, pad))
        flat += [w, b.reshape(1, -1)]

    act_flags = tuple(not (i == n_enc - 1 or i == n_total - 1)
                      for i in range(n_total))
    return {
        "flat": tuple(flat),
        "act_flags": act_flags,
        "in_dim": int(params[0][0].shape[0]),
        "out_dim": int(out_dim),
        "padded_out": int(padded_out),
    }


def autoencoder_forward(x, prep, *, negative_slope=0.1, max_batch_block=1024):
    """Fused AutoEncoder forward: one pallas_call for all layers.

    Small batches (<= max_batch_block rows) run as one un-gridded block; larger
    batches are padded to a whole number of batch tiles and gridded over the
    batch axis with "parallel" semantics (weights stay VMEM-resident).
    """
    flat = prep["flat"]
    act_flags = prep["act_flags"]
    out_dim, padded_out = prep["out_dim"], prep["padded_out"]

    batch, in_dim = x.shape
    assert in_dim == prep["in_dim"], "input width mismatch with params"
    x = x.astype(jnp.float32)

    kernel = functools.partial(
        _autoencoder_kernel, act_flags=act_flags, negative_slope=negative_slope
    )

    n_layers = len(act_flags)
    layer_widths = [in_dim] + [int(flat[2 * i].shape[1]) for i in range(n_layers)]
    max_width = max(layer_widths)
    param_bytes = sum(int(a.size) * 4 for a in flat)
    flops = 2 * batch * sum(int(flat[2 * i].shape[0]) * int(flat[2 * i].shape[1])
                            for i in range(n_layers))

    def _vmem_limit(rows):
        # 2x double-buffered x / out tiles + single weight copy + activation
        # headroom, capped at 64 MiB so the same budget is legal on v7x.
        est = (param_bytes
               + 2 * rows * in_dim * 4
               + 2 * rows * padded_out * 4
               + 4 * rows * max_width * 4)
        return int(min(max(est + (4 << 20), 16 << 20), 64 << 20))

    # Whole-array VMEM residency for the grid-invariant weights/biases: DMA'd
    # once, block index never changes, no per-step streaming.
    weight_spec = pl.BlockSpec(memory_space=pltpu.MemorySpace.VMEM)

    mb = max(_SUBLANES, (max_batch_block // _SUBLANES) * _SUBLANES)

    if batch <= mb:
        # Small batch: single fused un-gridded block (no pipeline bookkeeping).
        cost = pl.CostEstimate(
            flops=flops, transcendentals=0,
            bytes_accessed=4 * (batch * in_dim + batch * padded_out) + param_bytes)
        out = pl.pallas_call(
            kernel,
            out_shape=jax.ShapeDtypeStruct((batch, padded_out), jnp.float32),
            in_specs=[weight_spec] * (1 + len(flat)),
            out_specs=pl.BlockSpec(memory_space=pltpu.MemorySpace.VMEM),
            compiler_params=pltpu.CompilerParams(
                vmem_limit_bytes=_vmem_limit(max(batch, _SUBLANES))),
            cost_estimate=cost,
        )(x, *flat)
        return out[:, :out_dim] if padded_out != out_dim else out

    # Large batch: grid over the batch axis. Balance the tile size across the
    # tile count so padding waste is small, keep it a multiple of 8 sublanes.
    num_tiles = -(-batch // mb)                      # >= 2 since batch > mb
    bt = _round_up(-(-batch // num_tiles), _SUBLANES)
    padded_batch = num_tiles * bt
    if padded_batch != batch:
        x = jnp.pad(x, ((0, padded_batch - batch), (0, 0)))

    cost = pl.CostEstimate(
        flops=flops, transcendentals=0,
        bytes_accessed=4 * (padded_batch * in_dim + padded_batch * padded_out)
        + param_bytes)

    in_specs = [pl.BlockSpec((bt, in_dim), lambda i: (i, 0))]
    in_specs += [weight_spec for _ in flat]

    out = pl.pallas_call(
        kernel,
        out_shape=jax.ShapeDtypeStruct((padded_batch, padded_out), jnp.float32),
        grid=(num_tiles,),
        in_specs=in_specs,
        out_specs=pl.BlockSpec((bt, padded_out), lambda i: (i, 0)),
        compiler_params=pltpu.CompilerParams(
            dimension_semantics=("parallel",),      # shards over v7x's 2 TCs
            vmem_limit_bytes=_vmem_limit(bt)),
        cost_estimate=cost,
    )(x, *flat)

    out = out[:batch]
    return out[:, :out_dim] if padded_out != out_dim else out


def init_autoencoder_params(layer_sizes, key):
    """Deterministic params matching AutoEncoder.__init__ / _initialize_weights.

    Encoder: Linear(sizes[i], sizes[i+1]) for i = 0..L-2
    Decoder: Linear(sizes[i], sizes[i-1]) for i = L-1..1
    Weights: xavier_uniform_ (bound = sqrt(6/(fan_in+fan_out)))
    Bias:    uniform(-std, std), std = sqrt(2/(fan_in+fan_out))
    Stored as (W^T [in, out], b [out]) for the kernel's x @ W + b form.
    """
    dims = []
    for i in range(len(layer_sizes) - 1):
        dims.append((layer_sizes[i], layer_sizes[i + 1]))      # encoder
    for i in range(len(layer_sizes) - 1, 0, -1):
        dims.append((layer_sizes[i], layer_sizes[i - 1]))      # decoder

    params = []
    for (fan_in, fan_out) in dims:
        key, kw, kb = jax.random.split(key, 3)
        w_bound = jnp.sqrt(6.0 / (fan_in + fan_out))
        b_std = jnp.sqrt(2.0 / (fan_in + fan_out))
        w = jax.random.uniform(
            kw, (fan_in, fan_out), jnp.float32, minval=-w_bound, maxval=w_bound
        )
        b = jax.random.uniform(
            kb, (fan_out,), jnp.float32, minval=-b_std, maxval=b_std
        )
        params.append((w, b))
    return params


def autoencoder_ref(x, params, layer_sizes):
    """Pure-JAX reference for correctness checking."""
    n_enc = len(layer_sizes) - 1
    n_total = 2 * n_enc
    h = x
    for idx, (w, b) in enumerate(params):
        h = h @ w + b
        if not (idx == n_enc - 1 or idx == n_total - 1):
            h = jnp.where(h > 0, h, 0.1 * h)
    return h


if __name__ == "__main__":
    key = jax.random.PRNGKey(0)
    layer_sizes = [32, 16, 8]          # input -> hidden -> latent
    kx1, kx2, kp = jax.random.split(key, 3)
    params = init_autoencoder_params(layer_sizes, kp)
    prep = prepare_params(params, layer_sizes)   # one-time: pad W/b, reshape b

    # Small-batch path: single fused un-gridded kernel.
    x_small = jax.random.normal(kx1, (8, layer_sizes[0]), jnp.float32)
    out_small = jax.block_until_ready(autoencoder_forward(x_small, prep))
    ref_small = autoencoder_ref(x_small, params, layer_sizes)
    assert out_small.shape == (8, layer_sizes[0])
    assert jnp.allclose(out_small, ref_small, atol=1e-5, rtol=1e-5), \
        "small-batch mismatch vs reference"

    # Large, non-divisible batch: padded to whole tiles, gridded over batch
    # with 'parallel' semantics (the old whole-batch fallback is gone).
    x_large = jax.random.normal(kx2, (300, layer_sizes[0]), jnp.float32)
    out_large = jax.block_until_ready(
        autoencoder_forward(x_large, prep, max_batch_block=128))
    ref_large = autoencoder_ref(x_large, params, layer_sizes)
    assert out_large.shape == (300, layer_sizes[0])
    assert jnp.allclose(out_large, ref_large, atol=1e-5, rtol=1e-5), \
        "large-batch mismatch vs reference"

    print("KERNEL_OK")
</pallas_src>

<mosaic_0001>
module attributes {stable_mosaic.version = 11 : i64} {
  func.func @_autoencoder_kernel(%arg0: memref<8x32xf32, #tpu.memory_space<vmem>>, %arg1: memref<32x16xf32, #tpu.memory_space<vmem>>, %arg2: memref<1x16xf32, #tpu.memory_space<vmem>>, %arg3: memref<16x8xf32, #tpu.memory_space<vmem>>, %arg4: memref<1x8xf32, #tpu.memory_space<vmem>>, %arg5: memref<8x16xf32, #tpu.memory_space<vmem>>, %arg6: memref<1x16xf32, #tpu.memory_space<vmem>>, %arg7: memref<16x128xf32, #tpu.memory_space<vmem>>, %arg8: memref<1x128xf32, #tpu.memory_space<vmem>>, %arg9: memref<8x128xf32, #tpu.memory_space<vmem>>) attributes {dimension_semantics = [], scalar_prefetch = 0 : i64, scratch_operands = 0 : i64, tpu.core_type = #tpu.core_type<tc>} {
    %c0 = arith.constant 0 : index
    %c0_0 = arith.constant 0 : index
    %0 = vector.load %arg0[%c0, %c0_0] : memref<8x32xf32, #tpu.memory_space<vmem>>, vector<8x32xf32>
    %c0_1 = arith.constant 0 : index
    %c0_2 = arith.constant 0 : index
    %1 = vector.load %arg1[%c0_1, %c0_2] : memref<32x16xf32, #tpu.memory_space<vmem>>, vector<32x16xf32>
    %c0_3 = arith.constant 0 : index
    %c0_4 = arith.constant 0 : index
    %2 = vector.load %arg2[%c0_3, %c0_4] : memref<1x16xf32, #tpu.memory_space<vmem>>, vector<1x16xf32>
    %cst = arith.constant dense<0.000000e+00> : vector<8x16xf32>
    %3 = tpu.matmul %0, %1, %cst {dimension_numbers = #tpu.dot_dimension_numbers<[1], [0], [0], [1], [0, 0, 1, 1], [], []>} : vector<8x32xf32>, vector<32x16xf32>, vector<8x16xf32> -> vector<8x16xf32>
    %4 = vector.broadcast %2 : vector<1x16xf32> to vector<8x16xf32>
    %5 = arith.addf %3, %4 : vector<8x16xf32>
    %cst_5 = arith.constant 1.000000e-01 : f32
    %6 = vector.broadcast %cst_5 : f32 to vector<8x16xf32>
    %7 = arith.mulf %6, %5 : vector<8x16xf32>
    %8 = arith.maximumf %5, %7 : vector<8x16xf32>
    %c0_6 = arith.constant 0 : index
    %c0_7 = arith.constant 0 : index
    %9 = vector.load %arg3[%c0_6, %c0_7] : memref<16x8xf32, #tpu.memory_space<vmem>>, vector<16x8xf32>
    %c0_8 = arith.constant 0 : index
    %c0_9 = arith.constant 0 : index
    %10 = vector.load %arg4[%c0_8, %c0_9] : memref<1x8xf32, #tpu.memory_space<vmem>>, vector<1x8xf32>
    %cst_10 = arith.constant dense<0.000000e+00> : vector<8x8xf32>
    %11 = tpu.matmul %8, %9, %cst_10 {dimension_numbers = #tpu.dot_dimension_numbers<[1], [0], [0], [1], [0, 0, 1, 1], [], []>} : vector<8x16xf32>, vector<16x8xf32>, vector<8x8xf32> -> vector<8x8xf32>
    %12 = vector.broadcast %10 : vector<1x8xf32> to vector<8x8xf32>
    %13 = arith.addf %11, %12 : vector<8x8xf32>
    %c0_11 = arith.constant 0 : index
    %c0_12 = arith.constant 0 : index
    %14 = vector.load %arg5[%c0_11, %c0_12] : memref<8x16xf32, #tpu.memory_space<vmem>>, vector<8x16xf32>
    %c0_13 = arith.constant 0 : index
    %c0_14 = arith.constant 0 : index
    %15 = vector.load %arg6[%c0_13, %c0_14] : memref<1x16xf32, #tpu.memory_space<vmem>>, vector<1x16xf32>
    %cst_15 = arith.constant dense<0.000000e+00> : vector<8x16xf32>
    %16 = tpu.matmul %13, %14, %cst_15 {dimension_numbers = #tpu.dot_dimension_numbers<[1], [0], [0], [1], [0, 0, 1, 1], [], []>} : vector<8x8xf32>, vector<8x16xf32>, vector<8x16xf32> -> vector<8x16xf32>
    %17 = vector.broadcast %15 : vector<1x16xf32> to vector<8x16xf32>
    %18 = arith.addf %16, %17 : vector<8x16xf32>
    %cst_16 = arith.constant 1.000000e-01 : f32
    %19 = vector.broadcast %cst_16 : f32 to vector<8x16xf32>
    %20 = arith.mulf %19, %18 : vector<8x16xf32>
    %21 = arith.maximumf %18, %20 : vector<8x16xf32>
    %c0_17 = arith.constant 0 : index
    %c0_18 = arith.constant 0 : index
    %22 = vector.load %arg7[%c0_17, %c0_18] : memref<16x128xf32, #tpu.memory_space<vmem>>, vector<16x128xf32>
    %c0_19 = arith.constant 0 : index
    %c0_20 = arith.constant 0 : index
    %23 = vector.load %arg8[%c0_19, %c0_20] : memref<1x128xf32, #tpu.memory_space<vmem>>, vector<1x128xf32>
    %cst_21 = arith.constant dense<0.000000e+00> : vector<8x128xf32>
    %24 = tpu.matmul %21, %22, %cst_21 {dimension_numbers = #tpu.dot_dimension_numbers<[1], [0], [0], [1], [0, 0, 1, 1], [], []>} : vector<8x16xf32>, vector<16x128xf32>, vector<8x128xf32> -> vector<8x128xf32>
    %25 = vector.broadcast %23 : vector<1x128xf32> to vector<8x128xf32>
    %26 = arith.addf %24, %25 : vector<8x128xf32>
    %c0_22 = arith.constant 0 : index
    %c0_23 = arith.constant 0 : index
    %27 = vector.load %arg9[%c0_22, %c0_23] : memref<8x128xf32, #tpu.memory_space<vmem>>, vector<8x128xf32>
    tpu.vector_store %arg9[%c0_22, %c0_23], %26 {strides = array<i32>} : memref<8x128xf32, #tpu.memory_space<vmem>>, vector<8x128xf32>,
    return
  }
}

</mosaic_0001>

<llo_original>
// kernel: tpu_custom_call.1
$region0: #{tpu_custom_call.1}
  #allocation0 [shape = 'u32[]', space=smem, size = 0x4, offset = 0x4, fixed_abs, tag = 'smem constant byte address 0x4 - core index']
  #allocation1 [shape = 'u32[72,128]{1,0:T(1,128)}', space=vmem, size = 0x9000, scoped, tag = 'internal scratch']
  %s0 = inlined_call_operand.vmem [shape: f32[8,32], index: 0, kind: input, shape index: {}]
  %s1 = inlined_call_operand.vmem [shape: f32[32,16], index: 1, kind: input, shape index: {}]
  %s2 = inlined_call_operand.vmem [shape: f32[1,16], index: 2, kind: input, shape index: {}]
  %s3 = inlined_call_operand.vmem [shape: f32[16,8], index: 3, kind: input, shape index: {}]
  %s4 = inlined_call_operand.vmem [shape: f32[1,8], index: 4, kind: input, shape index: {}]
  %s5 = inlined_call_operand.vmem [shape: f32[8,16], index: 5, kind: input, shape index: {}]
  %s6 = inlined_call_operand.vmem [shape: f32[1,16], index: 6, kind: input, shape index: {}]
  %s7 = inlined_call_operand.vmem [shape: f32[16,128], index: 7, kind: input, shape index: {}]
  %s8 = inlined_call_operand.vmem [shape: f32[1,128], index: 8, kind: input, shape index: {}]
  %s9 = inlined_call_operand.hbm [shape: f32[8,128], index: 9, kind: output, shape index: {}]
  %s10 = sld [smem:[#allocation0]]
  $region46: #{tpu_custom_call.1} parent=0
    _
  %s12 = ssub.s32 1, %s10
  %s13 = scalar_select 0, %s12, %s10
  $region1: #{tpu_custom_call.1} parent=0
    #allocation2 [shape = 'u8[4096]{0}', space=vmem, size = 0x1000, scoped, tag = 'output window, operand 0, single buffered']
    #allocation3 [shape = 's32[1]{0}', space=sflag, size = 0x4, scoped, tag = 'scoped memory for tpu_custom_call.1']
    %14 = vsyncpa [#allocation3], 0
    // Predicated region
    $region2: #{tpu_custom_call.1} parent=1 // pred_check
      _
    $region3: #{tpu_custom_call.1} parent=1 // pred_check_branch
      %16 = sbr.rel (0) target = $region5
    $region4: #{tpu_custom_call.1} parent=1 // pred_region
      _
    $region5: #{tpu_custom_call.1} parent=1 // pred_fallthru
      _
    // Predicated region
    $region6: #{tpu_custom_call.1} parent=1 // pred_check
      _
    $region7: #{tpu_custom_call.1} parent=1 // pred_check_branch
      %18 = sbr.rel (0) target = $region9
    $region8: #{tpu_custom_call.1} parent=1 // pred_region
      _
    $region9: #{tpu_custom_call.1} parent=1 // pred_fallthru
      _
    // Predicated region
    $region10: #{tpu_custom_call.1} parent=1 // pred_check
      _
    $region11: #{tpu_custom_call.1} parent=1 // pred_check_branch
      %20 = sbr.rel (0) target = $region13
    $region12: #{tpu_custom_call.1} parent=1 // pred_region
      _
    $region13: #{tpu_custom_call.1} parent=1 // pred_fallthru
      _
    // Predicated region
    $region14: #{tpu_custom_call.1} parent=1 // pred_check
      _
    $region15: #{tpu_custom_call.1} parent=1 // pred_check_branch
      %22 = sbr.rel (0) target = $region17
    $region16: #{tpu_custom_call.1} parent=1 // pred_region
      _
    $region17: #{tpu_custom_call.1} parent=1 // pred_fallthru
      _
    // Predicated region
    $region18: #{tpu_custom_call.1} parent=1 // pred_check
      _
    $region19: #{tpu_custom_call.1} parent=1 // pred_check_branch
      %24 = sbr.rel (0) target = $region21
    $region20: #{tpu_custom_call.1} parent=1 // pred_region
      _
    $region21: #{tpu_custom_call.1} parent=1 // pred_fallthru
      _
    // Predicated region
    $region22: #{tpu_custom_call.1} parent=1 // pred_check
      _
    $region23: #{tpu_custom_call.1} parent=1 // pred_check_branch
      %26 = sbr.rel (0) target = $region25
    $region24: #{tpu_custom_call.1} parent=1 // pred_region
      _
    $region25: #{tpu_custom_call.1} parent=1 // pred_fallthru
      _
    // Predicated region
    $region26: #{tpu_custom_call.1} parent=1 // pred_check
      _
    $region27: #{tpu_custom_call.1} parent=1 // pred_check_branch
      %28 = sbr.rel (0) target = $region29
    $region28: #{tpu_custom_call.1} parent=1 // pred_region
      _
    $region29: #{tpu_custom_call.1} parent=1 // pred_fallthru
      _
    // Predicated region
    $region30: #{tpu_custom_call.1} parent=1 // pred_check
      _
    $region31: #{tpu_custom_call.1} parent=1 // pred_check_branch
      %30 = sbr.rel (0) target = $region33
    $region32: #{tpu_custom_call.1} parent=1 // pred_region
      _
    $region33: #{tpu_custom_call.1} parent=1 // pred_fallthru
      _
    // Predicated region
    $region34: #{tpu_custom_call.1} parent=1 // pred_check
      _
    $region35: #{tpu_custom_call.1} parent=1 // pred_check_branch
      %32 = sbr.rel (0) target = $region37
    $region36: #{tpu_custom_call.1} parent=1 // pred_region
      _
    $region37: #{tpu_custom_call.1} parent=1 // pred_fallthru
      _
    %v33 = vld [vmem:[%s0] sm:$0xff]
    %v34 = vld [vmem:[%s1] sm:$0xff]
    %v35 = vld [vmem:[%s1 + $0x8] sm:$0xff]
    %v36 = vld [vmem:[%s1 + $0x10] sm:$0xff]
    %v37 = vld [vmem:[%s1 + $0x18] sm:$0xff]
    %v38 = vld [vmem:[%s2] sm:$0x1]
    %v40 = vperm.slane %v38, 0
    %vm42 = vcmask 261120
    %v44 = vsel %vm42, %v33, 0
    %46 = vmatpush.msra.mxu0 0.0
    %47 = vmatpush.msra.mxu0 0.0
    %48 = vmatpush.msra.mxu0 0.0
    %49 = vmatpush.msra.mxu0 0.0
    %50 = vmatpush.msra.mxu0 0.0
    %51 = vmatpush.msra.mxu0 0.0
    %52 = vmatpush.msra.mxu0 0.0
    %53 = vmatpush.msra.mxu0 0.0
    %54 = vmatpush.msra.mxu0 0.0
    %55 = vmatpush.msra.mxu0 0.0
    %56 = vmatpush.msra.mxu0 0.0
    %57 = vmatpush.msra.mxu0 0.0
    %58 = vmatpush.msra.mxu0 %v37
    %59 = vmatpush.msra.mxu0 %v36
    %60 = vmatpush.msra.mxu0 %v35
    %61 = vmatpush.msra.mxu0 %v34
    %62 = vmatmul.f32.gmra.mxu0 %v44
    %v63 = vpop.f32.mrf.mxu0
    %v64 = vadd.f32 %v40, %v63
    %65 = vdwg.mxu0
    %v66 = vmul.f32 %v64, 0.1
    %v67 = vmax.f32 %v64, %v66
    %v68 = vld [vmem:[%s3] sm:$0xff]
    %v69 = vld [vmem:[%s3 + $0x8] sm:$0xff]
    %v70 = vld [vmem:[%s4] sm:$0x1]
    %v72 = vperm.slane %v70, 0
    %vm74 = vcmask 130048
    %v76 = vsel %vm74, %v67, 0
    %78 = vmatpush.msra.mxu0 0.0
    %79 = vmatpush.msra.mxu0 0.0
    %80 = vmatpush.msra.mxu0 0.0
    %81 = vmatpush.msra.mxu0 0.0
    %82 = vmatpush.msra.mxu0 0.0
    %83 = vmatpush.msra.mxu0 0.0
    %84 = vmatpush.msra.mxu0 0.0
    %85 = vmatpush.msra.mxu0 0.0
    %86 = vmatpush.msra.mxu0 0.0
    %87 = vmatpush.msra.mxu0 0.0
    %88 = vmatpush.msra.mxu0 0.0
    %89 = vmatpush.msra.mxu0 0.0
    %90 = vmatpush.msra.mxu0 0.0
    %91 = vmatpush.msra.mxu0 0.0
    %92 = vmatpush.msra.mxu0 %v69
    %93 = vmatpush.msra.mxu0 %v68
    %94 = vmatmul.f32.gmra.mxu0 %v76
    %v95 = vpop.f32.mrf.mxu0
    %v96 = vadd.f32 %v72, %v95
    %97 = vdwg.mxu0
    %v98 = vld [vmem:[%s5] sm:$0xff]
    %v99 = vld [vmem:[%s6] sm:$0x1]
    %v101 = vperm.slane %v99, 0
    %vm103 = vcmask 64512
    %v105 = vsel %vm103, %v96, 0
    %107 = vmatpush.msra.mxu0 0.0
    %108 = vmatpush.msra.mxu0 0.0
    %109 = vmatpush.msra.mxu0 0.0
    %110 = vmatpush.msra.mxu0 0.0
    %111 = vmatpush.msra.mxu0 0.0
    %112 = vmatpush.msra.mxu0 0.0
    %113 = vmatpush.msra.mxu0 0.0
    %114 = vmatpush.msra.mxu0 0.0
    %115 = vmatpush.msra.mxu0 0.0
    %116 = vmatpush.msra.mxu0 0.0
    %117 = vmatpush.msra.mxu0 0.0
    %118 = vmatpush.msra.mxu0 0.0
    %119 = vmatpush.msra.mxu0 0.0
    %120 = vmatpush.msra.mxu0 0.0
    %121 = vmatpush.msra.mxu0 0.0
    %122 = vmatpush.msra.mxu0 %v98
    %123 = vmatmul.f32.gmra.mxu0 %v105
    %v124 = vpop.f32.mrf.mxu0
    %v125 = vadd.f32 %v101, %v124
    %126 = vdwg.mxu0
    %v127 = vmul.f32 %v125, 0.1
    %v128 = vmax.f32 %v125, %v127
    %v129 = vld [vmem:[%s7] sm:$0xff]
    %v130 = vld [vmem:[%s7 + $0x8] sm:$0xff]
    %v131 = vld [vmem:[%s8] sm:$0x1]
    %v133 = vperm.slane %v131, 0
    %v136 = vsel %vm74, %v128, 0
    %138 = vmatpush.msra.mxu0 0.0
    %139 = vmatpush.msra.mxu0 0.0
    %140 = vmatpush.msra.mxu0 0.0
    %141 = vmatpush.msra.mxu0 0.0
    %142 = vmatpush.msra.mxu0 0.0
    %143 = vmatpush.msra.mxu0 0.0
    %144 = vmatpush.msra.mxu0 0.0
    %145 = vmatpush.msra.mxu0 0.0
    %146 = vmatpush.msra.mxu0 0.0
    %147 = vmatpush.msra.mxu0 0.0
    %148 = vmatpush.msra.mxu0 0.0
    %149 = vmatpush.msra.mxu0 0.0
    %150 = vmatpush.msra.mxu0 0.0
    %151 = vmatpush.msra.mxu0 0.0
    %152 = vmatpush.msra.mxu0 %v130
    %153 = vmatpush.msra.mxu0 %v129
    %154 = vmatmul.f32.gmra.mxu0 %v136
    %v155 = vpop.f32.mrf.mxu0
    %v156 = vadd.f32 %v133, %v155
    %157 = vdwg.mxu0
    %158 = vst [vmem:[#allocation2] sm:$0xff] %v156
    // Predicated region
    $region38: #{tpu_custom_call.1} parent=1 // pred_check
      _
    $region39: #{tpu_custom_call.1} parent=1 // pred_check_branch
      %160 = sbr.rel (0) target = $region41
    $region40: #{tpu_custom_call.1} parent=1 // pred_region
      %162 = vsyncadd [#allocation3], 0
      %s164 = sshll.u32 [#allocation2], 4
      %s165 = int_to_ptr.vmem [resolvable:$true] %s164
      %s166 = sshll.u32 %s9, 4
      %s167 = int_to_ptr.hbm [resolvable:$true] %s166
      %169 = dma.vmem_to_hbm [thread:$0]  %s165, 128, %s167, [#allocation3]
    $region41: #{tpu_custom_call.1} parent=1 // pred_fallthru
      _
    // Predicated region
    $region42: #{tpu_custom_call.1} parent=1 // pred_check
      _
    $region43: #{tpu_custom_call.1} parent=1 // pred_check_branch
      %171 = sbr.rel (0) target = $region45
    $region44: #{tpu_custom_call.1} parent=1 // pred_region
      %173 = dma.done [#allocation3], 128
    $region45: #{tpu_custom_call.1} parent=1 // pred_fallthru
      _
    %174 = vsyncpa [#allocation3], 1

</llo_original>
